<compile_context>
chip_gen: v5e
topology: v5e:2x2
jax: 0.10.0
libtpu: 0.0.40
codegen_flags: <defaults>
</compile_context>

<pallas_src>
import jax
import jax.numpy as jnp
from jax import lax
from jax.experimental import pallas as pl
from jax.experimental.pallas import tpu as pltpu


def _conv_t_kernel(x_ref, w_ref, b_ref, o_ref):
    # x_ref : (1, 9*Cin, TILE)   im2col columns, one batch element / HW tile
    # w_ref : (4*Cout, 9*Cin)    packed sub-pixel weight (structural zeros)
    # b_ref : (4*Cout, 1)        f32 bias, row r = (py*2+px)*Cout + co
    # o_ref : (1, 4*Cout, TILE)  lane-dense output slab
    acc = jnp.dot(w_ref[...], x_ref[0],
                  preferred_element_type=jnp.float32)        # (4*Cout, TILE) f32
    o_ref[0] = (acc + b_ref[...]).astype(o_ref.dtype)


def _pick_hw_tile(hw):
    """Largest lane-aligned (multiple-of-128) tile dividing hw; prefer >=2 tiles."""
    for t in (2048, 1024, 512, 256, 128):
        if hw % t == 0 and hw // t >= 2:
            return t
    for t in (2048, 1024, 512, 256, 128):
        if hw % t == 0:
            return t
    return hw  # fallback: single (possibly lane-padded) tile


def conv_transpose_4x4_s2_p1(x, weight, bias):
    """PyTorch-semantics ConvTranspose2d(kernel=4, stride=2, padding=1).

    x      : (B, Cin, H, W)
    weight : (Cin, Cout, 4, 4)   (PyTorch ConvTranspose2d weight layout)
    bias   : (Cout,)
    returns: (B, Cout, 2H, 2W), dtype == x.dtype
    """
    B, Cin, H, W = x.shape
    Cout = weight.shape[1]
    HW = H * W
    dt = x.dtype

    # ---- wrapper-side packing (tiny, fused by XLA under jit) --------------
    # 3x3 channel-major im2col of the zero-padded input:
    #   x9[b, (sy*3+sx)*Cin + ci, i*W + j] = x_pad[b, ci, i+sy, j+sx]
    x_pad = jnp.pad(x, ((0, 0), (0, 0), (1, 1), (1, 1)))
    cols = [x_pad[:, :, sy:sy + H, sx:sx + W]
            for sy in range(3) for sx in range(3)]
    x9 = jnp.concatenate(cols, axis=1).reshape(B, 9 * Cin, HW).astype(dt)

    # Packed sub-pixel weight:
    #   w9[(py*2+px)*Cout + co, (sy*3+sx)*Cin + ci] = W[ci, co, 3-py-2dy, 3-px-2dx]
    # with sy = py+dy, sx = px+dx (dy,dx in {0,1}); zero elsewhere.
    w9 = jnp.zeros((4 * Cout, 9 * Cin), dtype=jnp.float32)
    for py in range(2):
        for px in range(2):
            for dy in range(2):
                for dx in range(2):
                    sy, sx = py + dy, px + dx
                    ky, kx = 3 - py - 2 * dy, 3 - px - 2 * dx
                    tap = weight[:, :, ky, kx].T.astype(jnp.float32)  # (Cout, Cin)
                    r0 = (py * 2 + px) * Cout
                    c0 = (sy * 3 + sx) * Cin
                    w9 = w9.at[r0:r0 + Cout, c0:c0 + Cin].set(tap)
    # NOTE: if x is bf16 the f32 weights are down-cast before the MXU (matches
    # the accumulate-in-f32 numerics of mixed-precision torch, not exact f32).
    w9 = w9.astype(dt)
    b9 = jnp.tile(bias.astype(jnp.float32), 4).reshape(4 * Cout, 1)

    TILE = _pick_hw_tile(HW)
    grid = (B, HW // TILE)

    out = pl.pallas_call(
        _conv_t_kernel,
        out_shape=jax.ShapeDtypeStruct((B, 4 * Cout, HW), dt),
        grid_spec=pl.GridSpec(
            grid=grid,
            in_specs=[
                pl.BlockSpec((1, 9 * Cin, TILE), lambda b, t: (b, 0, t)),
                pl.BlockSpec((4 * Cout, 9 * Cin), lambda b, t: (0, 0)),
                pl.BlockSpec((4 * Cout, 1), lambda b, t: (0, 0)),
            ],
            out_specs=pl.BlockSpec((1, 4 * Cout, TILE), lambda b, t: (b, 0, t)),
        ),
        compiler_params=pltpu.CompilerParams(
            dimension_semantics=("parallel", "parallel"),
            vmem_limit_bytes=32 * 1024 * 1024,
        ),
    )(x9, w9, b9)

    # (b, py, px, co, i, j) -> (b, co, 2i+py, 2j+px)  : NCHW, matches PyTorch.
    out = out.reshape(B, 2, 2, Cout, H, W)
    out = out.transpose(0, 3, 4, 1, 5, 2).reshape(B, Cout, 2 * H, 2 * W)
    return out


# Pure-JAX/XLA reference: ConvTranspose == lhs-dilated conv with the kernel
# flipped and in/out channel axes swapped.
def reference(x, weight, bias):
    Cout = weight.shape[1]
    w_flip = jnp.flip(weight, axis=(2, 3)).transpose(1, 0, 2, 3)  # (Cout, Cin, 4, 4)
    y = lax.conv_general_dilated(
        x, w_flip,
        window_strides=(1, 1),
        padding=[(2, 2), (2, 2)],     # k - 1 - p = 4 - 1 - 1 = 2
        lhs_dilation=(2, 2),
        dimension_numbers=('NCHW', 'OIHW', 'NCHW'),
    )
    return y + bias.reshape(1, Cout, 1, 1)


if __name__ == "__main__":
    B, C, H, W = 2, 4, 16, 16

    key = jax.random.PRNGKey(0)
    kx, kw, kb = jax.random.split(key, 3)

    x = jax.random.normal(kx, (B, C, H, W), dtype=jnp.float32)

    # Deterministic PyTorch-style init bound: 1/sqrt(fan_in), fan_in = C*k*k.
    bound = 1.0 / jnp.sqrt(jnp.float32(C * 4 * 4))
    weight = jax.random.uniform(kw, (C, C, 4, 4), jnp.float32, -bound, bound)
    bias = jax.random.uniform(kb, (C,), jnp.float32, -bound, bound)

    fwd = jax.jit(conv_transpose_4x4_s2_p1)
    out = jax.block_until_ready(fwd(x, weight, bias))

    ref = reference(x, weight, bias)
    assert out.shape == (B, C, 2 * H, 2 * W), out.shape
    assert jnp.allclose(out, ref, atol=1e-4, rtol=1e-4), \
        float(jnp.max(jnp.abs(out - ref)))

    print("KERNEL_OK")
</pallas_src>

<mosaic_0001>
module attributes {stable_mosaic.version = 11 : i64} {
  func.func @_conv_t_kernel(%arg0: i32, %arg1: i32, %arg2: memref<1x36x128xf32, #tpu.memory_space<vmem>>, %arg3: memref<16x36xf32, #tpu.memory_space<vmem>>, %arg4: memref<16x1xf32, #tpu.memory_space<vmem>>, %arg5: memref<1x16x128xf32, #tpu.memory_space<vmem>>) attributes {dimension_semantics = [#tpu.dimension_semantics<parallel>, #tpu.dimension_semantics<parallel>], iteration_bounds = array<i64: 2, 2>, scalar_prefetch = 0 : i64, scratch_operands = 0 : i64, tpu.core_type = #tpu.core_type<tc>, window_params = [{transform_indices = @transform_0, window_bounds = array<i64: 1, 36, 128>}, {pipeline_mode = #tpu.pipeline_mode<synchronous>, transform_indices = @transform_1, window_bounds = array<i64: 16, 36>}, {pipeline_mode = #tpu.pipeline_mode<synchronous>, transform_indices = @transform_2, window_bounds = array<i64: 16, 1>}, {transform_indices = @transform_3, window_bounds = array<i64: 1, 16, 128>}]} {
    %c0 = arith.constant 0 : index
    %c0_0 = arith.constant 0 : index
    %0 = vector.load %arg3[%c0, %c0_0] : memref<16x36xf32, #tpu.memory_space<vmem>>, vector<16x36xf32>
    %c0_1 = arith.constant 0 : index
    %c0_2 = arith.constant 0 : index
    %c0_3 = arith.constant 0 : index
    %1 = vector.load %arg2[%c0_1, %c0_2, %c0_3] : memref<1x36x128xf32, #tpu.memory_space<vmem>>, vector<1x36x128xf32>
    %2 = vector.shape_cast %1 : vector<1x36x128xf32> to vector<36x128xf32>
    %cst = arith.constant dense<0.000000e+00> : vector<16x128xf32>
    %3 = tpu.matmul %0, %2, %cst {dimension_numbers = #tpu.dot_dimension_numbers<[1], [0], [0], [1], [0, 0, 1, 1], [], []>} : vector<16x36xf32>, vector<36x128xf32>, vector<16x128xf32> -> vector<16x128xf32>
    %c0_4 = arith.constant 0 : index
    %c0_5 = arith.constant 0 : index
    %4 = vector.load %arg4[%c0_4, %c0_5] : memref<16x1xf32, #tpu.memory_space<vmem>>, vector<16x1xf32>
    %5 = vector.broadcast %4 : vector<16x1xf32> to vector<16x128xf32>
    %6 = arith.addf %3, %5 : vector<16x128xf32>
    %c0_6 = arith.constant 0 : index
    %c0_7 = arith.constant 0 : index
    %c0_8 = arith.constant 0 : index
    %7 = vector.load %arg5[%c0_6, %c0_7, %c0_8] : memref<1x16x128xf32, #tpu.memory_space<vmem>>, vector<1x16x128xf32>
    %8 = vector.shape_cast %7 : vector<1x16x128xf32> to vector<16x128xf32>
    %9 = vector.shape_cast %6 : vector<16x128xf32> to vector<1x16x128xf32>
    tpu.vector_store %arg5[%c0_6, %c0_7, %c0_8], %9 {strides = array<i32>} : memref<1x16x128xf32, #tpu.memory_space<vmem>>, vector<1x16x128xf32>,
    return
  }
  func.func @transform_0(%arg0: i32, %arg1: i32) -> (i32, i32, i32) {
    %c0_i32 = arith.constant 0 : i32
    %c0_i32_0 = arith.constant 0 : i32
    return %arg0, %c0_i32, %arg1 : i32, i32, i32
  }
  func.func @transform_1(%arg0: i32, %arg1: i32) -> (i32, i32) {
    %c0_i32 = arith.constant 0 : i32
    %c0_i32_0 = arith.constant 0 : i32
    %c0_i32_1 = arith.constant 0 : i32
    return %c0_i32, %c0_i32_0 : i32, i32
  }
  func.func @transform_2(%arg0: i32, %arg1: i32) -> (i32, i32) {
    %c0_i32 = arith.constant 0 : i32
    %c0_i32_0 = arith.constant 0 : i32
    %c0_i32_1 = arith.constant 0 : i32
    return %c0_i32, %c0_i32_0 : i32, i32
  }
  func.func @transform_3(%arg0: i32, %arg1: i32) -> (i32, i32, i32) {
    %c0_i32 = arith.constant 0 : i32
    %c0_i32_0 = arith.constant 0 : i32
    return %arg0, %c0_i32, %arg1 : i32, i32, i32
  }
}

</mosaic_0001>

<llo_original>
// kernel: tile.8
$region0: #{tile.8}
  #allocation0 [shape = 's32[1]{0}', space=sflag, size = 0x4, scoped, tag = 'scoped memory for tile.8']
  %s0 = inlined_call_operand.vmem [shape: f32[4], index: 0, kind: input, shape index: {}]
  %s1 = inlined_call_operand.vmem [shape: f32[4,4], index: 1, kind: output, shape index: {}]
  // Predicated region
  $region2: #{tile.8} parent=0 // pred_check
    _
  $region3: #{tile.8} parent=0 // pred_check_branch
    %3 = sbr.rel (0) target = $region5
  $region4: #{tile.8} parent=0 // pred_region
    _
  $region5: #{tile.8} parent=0 // pred_fallthru
    _
  %v4 = vld [vmem:[%s0] ss:$0 sm:$0xff]
  %5 = vst [vmem:[%s1] sm:$0xf] %v4

// kernel: tile.0
$region0: #{tile.0}
  %s0 = inlined_call_operand.vmem [shape: f32[4,4], index: 0, kind: input, shape index: {}]
  %s1 = inlined_call_operand.vmem [shape: f32[16,1], index: 1, kind: output, shape index: {}]
  $region1: #{tile.0} parent=0
    #allocation0 [shape = 'u8[4096]{0}', space=vmem, size = 0x1000, scoped, tag = 'scoped mem for input reshape']
    %s3 = ssub.s32 16, 1
    %v4 = vld [vmem:[%s0] sm:%s3]
    %5 = vst [vmem:[#allocation0] sm:%s3] %v4
    %v6 = vld [vmem:[#allocation0] sm:$0xf]
    %vm7 = vcmask 7168
    %8 = vst.msk [vmem:[%s1] ss:$4 sm:$0xf] %vm7, %v6
    %v9 = vld [vmem:[#allocation0] sm:$0xf]
    %10 = vrot.lane.b32.xlu0 %v9, 127
    %v11 = vpop.permute.xlu0 %10
    %vm12 = vcmask 7168
    %s13 = scalar_lea.vmem %s1, 1
    %14 = vst.msk [vmem:[%s13] ss:$4 sm:$0xf] %vm12, %v11
    %v15 = vld [vmem:[#allocation0] sm:$0xf]
    %16 = vrot.lane.b32.xlu0 %v15, 126
    %v17 = vpop.permute.xlu0 %16
    %vm18 = vcmask 7168
    %s19 = scalar_lea.vmem %s1, 2
    %20 = vst.msk [vmem:[%s19] ss:$4 sm:$0xf] %vm18, %v17
    %v21 = vld [vmem:[#allocation0] sm:$0xf]
    %22 = vrot.lane.b32.xlu0 %v21, 125
    %v23 = vpop.permute.xlu0 %22
    %vm24 = vcmask 7168
    %s25 = scalar_lea.vmem %s1, 3
    %26 = vst.msk [vmem:[%s25] ss:$4 sm:$0xf] %vm24, %v23

// kernel: conv_transpose_4x4_s2_p1.1
$region0: #{conv_transpose_4x4_s2_p1.1}
  #allocation0 [shape = 'u32[]', space=smem, size = 0x4, offset = 0x4, fixed_abs, tag = 'smem constant byte address 0x4 - core index']
  #allocation1 [shape = 'u32[72,128]{1,0:T(1,128)}', space=vmem, size = 0x9000, scoped, tag = 'internal scratch']
  %s0 = inlined_call_operand.vmem [shape: f32[2,36,256], index: 0, kind: input, shape index: {}]
  %s1 = inlined_call_operand.vmem [shape: f32[16,36], index: 1, kind: input, shape index: {}]
  %s2 = inlined_call_operand.vmem [shape: f32[16,1], index: 2, kind: input, shape index: {}]
  %s3 = inlined_call_operand.vmem [shape: f32[2,16,256], index: 3, kind: output, shape index: {}]
  %s4 = sld [smem:[#allocation0]]
  $region117: #{conv_transpose_4x4_s2_p1.1} parent=0
    _
  %s6 = ssub.s32 1, %s4
  %s7 = scalar_select 0, %s6, %s4
  $region1: #{conv_transpose_4x4_s2_p1.1} parent=0
    #allocation2 [shape = 'u8[40960]{0}', space=vmem, size = 0xa000, scoped, tag = 'input window, operand 0']
    #allocation3 [shape = 'u8[16384]{0}', space=vmem, size = 0x4000, scoped, tag = 'output window, operand 0']
    loop: start=0, step=1, limit=6
    $region2: #{conv_transpose_4x4_s2_p1.1} parent=1 // loop_pre_header
      _
    $region3: #{conv_transpose_4x4_s2_p1.1} parent=1 // loop_header
      %s9 = sphi 0, %s13
      %p10 = scmp.ge.s32.totalorder %s9, 6
      %s16 = sphi 0, %s28
      %s17 = sphi 0, %s24
      %s18 = sphi 0, %s16
      %s19 = sphi 0, %s17
      %s20 = sphi 0, %s18
      %s21 = sphi 0, %s19
      %s33 = sphi 0, %s35
      %s36 = sphi 0, %s33
      %s37 = sphi 0, %s36
      %s53 = sphi 0, %s37
      %s57 = sphi 0, %s57
      %s59 = sphi 0, %s57
      %s60 = sphi 0, %s59
      %s74 = sphi 0, %s60
      %s78 = sphi 0, %s78
      %s80 = sphi 0, %s78
      %s81 = sphi 0, %s80
      %s95 = sphi 0, %s81
      %s103 = sphi 0, %s105
      %s106 = sphi 0, %s103
      %s107 = sphi 0, %s106
      %s123 = sphi 0, %s107
    $region4: #{conv_transpose_4x4_s2_p1.1} parent=1 // loop_header_branch
      %12 = sbr.rel (%p10) target = $region8
    $region5: #{conv_transpose_4x4_s2_p1.1} parent=1 // loop_body
      %s14 = ssub.s32 %s9, 1
      %s15 = ssub.s32 %s9, 2
      %s22 = sadd.s32 1, %s17
      %p23 = scmp.ge.s32.totalorder %s22, 2
      %s24 = scalar_select %p23, 0, %s22
      %s25 = sadd.s32 1, %s16
      %s26 = scalar_select %p23, %s25, %s16
      %p27 = scmp.ge.s32.totalorder %s26, 2
      %s28 = scalar_select %p27, 0, %s26
      %s29 = ssub.s32 %s16, %s28
      %s30 = ssub.s32 %s17, %s24
      %s31 = sor.u32 %s29, %s30
      %p32 = scmp.eq.s32.totalorder %s31, 0
      %s34 = sadd.s32 %s33, 1
      %s35 = scalar_select %p32, %s33, %s34
      %p38 = pneg %p32
      %p39 = scmp.eq.s32.totalorder %s9, 3
      %p40 = por %p38, %p39
      %p41 = scmp.ne.s32.totalorder %s33, %s36
      %p42 = scmp.eq.s32.totalorder %s9, 0
      %p43 = por %p41, %p42
      %p44 = scmp.ne.s32.totalorder %s33, %s36
      %p45 = scmp.eq.s32.totalorder %s14, 3
      %p46 = por %p44, %p45
      %p47 = scmp.ne.s32.totalorder %s36, %s37
      %p48 = scmp.eq.s32.totalorder %s14, 0
      %p49 = por %p47, %p48
      %p50 = scmp.ne.s32.totalorder %s36, %s37
      %p51 = scmp.eq.s32.totalorder %s15, 3
      %p52 = por %p50, %p51
      %p54 = scmp.ne.s32.totalorder %s37, %s53
      %p55 = scmp.eq.s32.totalorder %s15, 0
      %p56 = por %p54, %p55
      %s58 = sadd.s32 %s57, 1
      %p61 = scmp.eq.s32.totalorder %s9, 3
      %p62 = scmp.ne.s32.totalorder %s57, %s59
      %p63 = scmp.eq.s32.totalorder %s9, 0
      %p64 = por %p62, %p63
      %p65 = scmp.ne.s32.totalorder %s57, %s59
      %p66 = scmp.eq.s32.totalorder %s14, 3
      %p67 = por %p65, %p66
      %p68 = scmp.ne.s32.totalorder %s59, %s60
      %p69 = scmp.eq.s32.totalorder %s14, 0
      %p70 = por %p68, %p69
      %p71 = scmp.ne.s32.totalorder %s59, %s60
      %p72 = scmp.eq.s32.totalorder %s15, 3
      %p73 = por %p71, %p72
      %p75 = scmp.ne.s32.totalorder %s60, %s74
      %p76 = scmp.eq.s32.totalorder %s15, 0
      %p77 = por %p75, %p76
      %s79 = sadd.s32 %s78, 1
      %p82 = scmp.eq.s32.totalorder %s9, 3
      %p83 = scmp.ne.s32.totalorder %s78, %s80
      %p84 = scmp.eq.s32.totalorder %s9, 0
      %p85 = por %p83, %p84
      %p86 = scmp.ne.s32.totalorder %s78, %s80
      %p87 = scmp.eq.s32.totalorder %s14, 3
      %p88 = por %p86, %p87
      %p89 = scmp.ne.s32.totalorder %s80, %s81
      %p90 = scmp.eq.s32.totalorder %s14, 0
      %p91 = por %p89, %p90
      %p92 = scmp.ne.s32.totalorder %s80, %s81
      %p93 = scmp.eq.s32.totalorder %s15, 3
      %p94 = por %p92, %p93
      %p96 = scmp.ne.s32.totalorder %s81, %s95
      %p97 = scmp.eq.s32.totalorder %s15, 0
      %p98 = por %p96, %p97
      %s99 = ssub.s32 %s16, %s28
      %s100 = ssub.s32 %s17, %s24
      %s101 = sor.u32 %s99, %s100
      %p102 = scmp.eq.s32.totalorder %s101, 0
      %s104 = sadd.s32 %s103, 1
      %s105 = scalar_select %p102, %s103, %s104
      %p108 = pneg %p102
      %p109 = scmp.eq.s32.totalorder %s9, 3
      %p110 = por %p108, %p109
      %p111 = scmp.ne.s32.totalorder %s103, %s106
      %p112 = scmp.eq.s32.totalorder %s9, 0
      %p113 = por %p111, %p112
      %p114 = scmp.ne.s32.totalorder %s103, %s106
      %p115 = scmp.eq.s32.totalorder %s14, 3
      %p116 = por %p114, %p115
      %p117 = scmp.ne.s32.totalorder %s106, %s107
      %p118 = scmp.eq.s32.totalorder %s14, 0
      %p119 = por %p117, %p118
      %p120 = scmp.ne.s32.totalorder %s106, %s107
      %p121 = scmp.eq.s32.totalorder %s15, 3
      %p122 = por %p120, %p121
      %p124 = scmp.ne.s32.totalorder %s107, %s123
      %p125 = scmp.eq.s32.totalorder %s15, 0
      %p126 = por %p124, %p125
      %p127 = scmp.le.s32.totalorder 1, %s9
      %p128 = scmp.lt.s32.totalorder %s9, 5
      %p129 = pnand %p127, %p128
      %p130 = pneg %p129
      // Predicated region
      $region9: #{conv_transpose_4x4_s2_p1.1} parent=5 // pred_check
        _
      $region10: #{conv_transpose_4x4_s2_p1.1} parent=5 // pred_check_branch
        %132 = sbr.rel (%p129) target = $region12
      $region11: #{conv_transpose_4x4_s2_p1.1} parent=5 // pred_region
        %s133 = ssub.s32 %s9, 1
        // Predicated region
        $region13: #{conv_transpose_4x4_s2_p1.1} parent=11 // pred_check
          %p134 = pneg %p70
        $region14: #{conv_transpose_4x4_s2_p1.1} parent=11 // pred_check_branch
          %136 = sbr.rel (%p134) target = $region16
        $region15: #{conv_transpose_4x4_s2_p1.1} parent=11 // pred_region
          _
        $region16: #{conv_transpose_4x4_s2_p1.1} parent=11 // pred_fallthru
          _
        // Predicated region
        $region17: #{conv_transpose_4x4_s2_p1.1} parent=11 // pred_check
          %p137 = pneg %p91
        $region18: #{conv_transpose_4x4_s2_p1.1} parent=11 // pred_check_branch
          %139 = sbr.rel (%p137) target = $region20
        $region19: #{conv_transpose_4x4_s2_p1.1} parent=11 // pred_region
          _
        $region20: #{conv_transpose_4x4_s2_p1.1} parent=11 // pred_fallthru
          _
      $region12: #{conv_transpose_4x4_s2_p1.1} parent=5 // pred_fallthru
        _
      %p140 = scmp.lt.s32.totalorder %s9, 4
      // Predicated region
      $region21: #{conv_transpose_4x4_s2_p1.1} parent=5 // pred_check
        %p141 = pneg %p140
      $region22: #{conv_transpose_4x4_s2_p1.1} parent=5 // pred_check_branch
        %143 = sbr.rel (%p141) target = $region24
      $region23: #{conv_transpose_4x4_s2_p1.1} parent=5 // pred_region
        // Predicated region
        $region25: #{conv_transpose_4x4_s2_p1.1} parent=23 // pred_check
          %p144 = pneg %p43
        $region26: #{conv_transpose_4x4_s2_p1.1} parent=23 // pred_check_branch
          %146 = sbr.rel (%p144) target = $region28
        $region27: #{conv_transpose_4x4_s2_p1.1} parent=23 // pred_region
          %s147 = sand.u32 %s33, 1
          %s148 = sand.u32 %s33, 1
          %s149 = smul.addr %s148, 40
          %s150 = scalar_lea.vmem [#allocation2], %s149
          %s151 = smul.addr %s16, 10
          %s152 = sadd.s32 %s17, %s151
          %s153 = smul.addr %s152, 8
          %s154 = scalar_lea.vmem %s0, %s153
          // Predicated region
          $region29: #{conv_transpose_4x4_s2_p1.1} parent=27 // pred_check
            _
          $region30: #{conv_transpose_4x4_s2_p1.1} parent=27 // pred_check_branch
            %156 = sbr.rel (0) target = $region32
          $region31: #{conv_transpose_4x4_s2_p1.1} parent=27 // pred_region
            // Predicated region
            $region33: #{conv_transpose_4x4_s2_p1.1} parent=31 // pred_check
              _
            $region34: #{conv_transpose_4x4_s2_p1.1} parent=31 // pred_check_branch
              %158 = sbr.rel (0) target = $region36
            $region35: #{conv_transpose_4x4_s2_p1.1} parent=31 // pred_region
              // Predicated region
              $region48: #{conv_transpose_4x4_s2_p1.1} parent=35 // pred_check
                _
              $region49: #{conv_transpose_4x4_s2_p1.1} parent=35 // pred_check_branch
                %182 = sbr.rel (0) target = $region51
              $region50: #{conv_transpose_4x4_s2_p1.1} parent=35 // pred_region
                loop: start=0, step=1, limit=1
                $region52: #{conv_transpose_4x4_s2_p1.1} parent=50 // loop_pre_header
                  _
                $region53: #{conv_transpose_4x4_s2_p1.1} parent=50 // loop_header
                  %s184 = sphi 0, %s188
                  %p185 = scmp.ge.s32.totalorder %s184, 1
                  %s189 = sphi %s154, %s154
                  %s190 = sphi %s150, %s150
                $region54: #{conv_transpose_4x4_s2_p1.1} parent=50 // loop_header_branch
                  %187 = sbr.rel (%p185) target = $region58
                $region55: #{conv_transpose_4x4_s2_p1.1} parent=50 // loop_body
                  %v191 = vld [vmem:[%s189] sm:$0xff]
                  %192 = vst [vmem:[%s190] sm:$0xff] %v191
                  %v193 = vld [vmem:[%s189 + $0x10] sm:$0xff]
                  %194 = vst [vmem:[%s190 + $0x8] sm:$0xff] %v193
                  %v195 = vld [vmem:[%s189 + $0x20] sm:$0xff]
                  %196 = vst [vmem:[%s190 + $0x10] sm:$0xff] %v195
                  %v197 = vld [vmem:[%s189 + $0x30] sm:$0xff]
                  %198 = vst [vmem:[%s190 + $0x18] sm:$0xff] %v197
                  %v199 = vld [vmem:[%s189 + $0x40] sm:$0xff]
                  %200 = vst [vmem:[%s190 + $0x20] sm:$0xff] %v199
                $region56: #{conv_transpose_4x4_s2_p1.1} parent=50 // loop_footer
                  %s188 = sadd.s32 1, %s184
                $region57: #{conv_transpose_4x4_s2_p1.1} parent=50 // loop_footer_branch
                  %183 = sbr.rel target = $region53
                $region58: #{conv_transpose_4x4_s2_p1.1} parent=50 // loop_exit
                  _
              $region51: #{conv_transpose_4x4_s2_p1.1} parent=35 // pred_fallthru
                _
              // Predicated region
              $region59: #{conv_transpose_4x4_s2_p1.1} parent=35 // pred_check
                _
              $region60: #{conv_transpose_4x4_s2_p1.1} parent=35 // pred_check_branch
                %202 = sbr.rel target = $region62
              $region61: #{conv_transpose_4x4_s2_p1.1} parent=35 // pred_region
                _
              $region62: #{conv_transpose_4x4_s2_p1.1} parent=35 // pred_fallthru
                _
            $region36: #{conv_transpose_4x4_s2_p1.1} parent=31 // pred_fallthru
              _
            // Predicated region
            $region37: #{conv_transpose_4x4_s2_p1.1} parent=31 // pred_check
              _
            $region38: #{conv_transpose_4x4_s2_p1.1} parent=31 // pred_check_branch
              %160 = sbr.rel target = $region40
            $region39: #{conv_transpose_4x4_s2_p1.1} parent=31 // pred_region
              %s162 = ssub.s32 256, 1
              loop: start=0, step=1, limit=1
              $region41: #{conv_transpose_4x4_s2_p1.1} parent=39 // loop_pre_header
                _
              $region42: #{conv_transpose_4x4_s2_p1.1} parent=39 // loop_header
                %s164 = sphi 0, %s168
                %p165 = scmp.ge.s32.totalorder %s164, 1
                %s169 = sphi %s154, %s154
                %s170 = sphi %s150, %s150
              $region43: #{conv_transpose_4x4_s2_p1.1} parent=39 // loop_header_branch
                %167 = sbr.rel (%p165) target = $region47
              $region44: #{conv_transpose_4x4_s2_p1.1} parent=39 // loop_body
                %v171 = vld [vmem:[%s169] sm:%s162]
                %172 = vst [vmem:[%s170] sm:%s162] %v171
                %v173 = vld [vmem:[%s169 + $0x10] sm:%s162]
                %174 = vst [vmem:[%s170 + $0x8] sm:%s162] %v173
                %v175 = vld [vmem:[%s169 + $0x20] sm:%s162]
                %176 = vst [vmem:[%s170 + $0x10] sm:%s162] %v175
                %v177 = vld [vmem:[%s169 + $0x30] sm:%s162]
                %178 = vst [vmem:[%s170 + $0x18] sm:%s162] %v177
                %v179 = vld [vmem:[%s169 + $0x40] sm:%s162]
                %180 = vst [vmem:[%s170 + $0x20] sm:%s162] %v179
              $region45: #{conv_transpose_4x4_s2_p1.1} parent=39 // loop_footer
                %s168 = sadd.s32 1, %s164
              $region46: #{conv_transpose_4x4_s2_p1.1} parent=39 // loop_footer_branch
                %163 = sbr.rel target = $region42
              $region47: #{conv_transpose_4x4_s2_p1.1} parent=39 // loop_exit
                _
            $region40: #{conv_transpose_4x4_s2_p1.1} parent=31 // pred_fallthru
              _
          $region32: #{conv_transpose_4x4_s2_p1.1} parent=27 // pred_fallthru
            _
          %203 = vnop
        $region28: #{conv_transpose_4x4_s2_p1.1} parent=23 // pred_fallthru
          _
      $region24: #{conv_transpose_4x4_s2_p1.1} parent=5 // pred_fallthru
        _
      %p204 = scmp.le.s32.totalorder 1, %s9
      %p205 = scmp.lt.s32.totalorder %s9, 5
      %p206 = pnand %p204, %p205
      %p207 = pneg %p206
      // Predicated region
      $region63: #{conv_transpose_4x4_s2_p1.1} parent=5 // pred_check
        _
      $region64: #{conv_transpose_4x4_s2_p1.1} parent=5 // pred_check_branch
        %209 = sbr.rel (%p206) target = $region66
      $region65: #{conv_transpose_4x4_s2_p1.1} parent=5 // pred_region
        %s210 = ssub.s32 %s9, 1
        %s211 = sand.u32 %s36, 1
        %s212 = sand.u32 %s36, 1
        %s213 = smul.addr %s212, 40
        %s214 = scalar_lea.vmem [#allocation2], %s213
        // Predicated region
        $region67: #{conv_transpose_4x4_s2_p1.1} parent=65 // pred_check
          %p215 = pneg %p49
        $region68: #{conv_transpose_4x4_s2_p1.1} parent=65 // pred_check_branch
          %217 = sbr.rel (%p215) target = $region70
        $region69: #{conv_transpose_4x4_s2_p1.1} parent=65 // pred_region
          _
        $region70: #{conv_transpose_4x4_s2_p1.1} parent=65 // pred_fallthru
          _
        %s218 = sand.u32 %s36, 1
        %s219 = sand.u32 %s36, 1
        %s220 = smul.addr %s219, 40
        %s221 = scalar_lea.vmem [#allocation2], %s220
        %p222 = pneg %p49
        %p223 = pneg %p46
        %p224 = pneg %p70
        %p225 = pneg %p67
        %p226 = pneg %p91
        %p227 = pneg %p88
        %p228 = pneg %p119
        %p229 = pneg %p116
        %s230 = sand.u32 %s106, 1
        %s231 = sand.u32 %s106, 1
        %s232 = smul.addr %s231, 16
        %s233 = scalar_lea.vmem [#allocation3], %s232
        %v234 = vld [vmem:[%s1] sm:$0xff]
        %v235 = vld [vmem:[%s1 + $0x8] sm:$0xff]
        %v236 = vld [vmem:[%s214] sm:$0xff]
        %v237 = vld [vmem:[%s214 + $0x8] sm:$0xff]
        %v238 = vld [vmem:[%s214 + $0x10] sm:$0xff]
        %v239 = vld [vmem:[%s214 + $0x18] sm:$0xff]
        %v240 = vld [vmem:[%s214 + $0x20] sm:$0xf]
        %v241 = vld [vmem:[%s2] sm:$0xff]
        %v242 = vld [vmem:[%s2 + $0x8] sm:$0xff]
        %244 = vset.pattern.permute.xlu0 0
        %245 = vperm.xlu0 %244, %v241
        %v246 = vpop.permute.xlu0 %245
        %249 = vset.pattern.permute.xlu0 0
        %250 = vperm.xlu0 %249, %v242
        %v251 = vpop.permute.xlu0 %250
        %vm253 = vcmask 293888
        %v255 = vsel %vm253, %v234, 0
        %v258 = vsel %vm253, %v235, 0
        %vm260 = vcmask 1043456
        %v262 = vsel %vm260, %v240, 0
        %264 = vmatpush.msra.mxu0 0.0
        %265 = vmatpush.msra.mxu0 0.0
        %266 = vmatpush.msra.mxu0 0.0
        %267 = vmatpush.msra.mxu0 0.0
        %268 = vmatpush.msra.mxu0 0.0
        %269 = vmatpush.msra.mxu0 0.0
        %270 = vmatpush.msra.mxu0 0.0
        %271 = vmatpush.msra.mxu0 0.0
        %272 = vmatpush.msra.mxu0 0.0
        %273 = vmatpush.msra.mxu0 0.0
        %274 = vmatpush.msra.mxu0 0.0
        %275 = vmatpush.msra.mxu0 %v262
        %276 = vmatpush.msra.mxu0 %v239
        %277 = vmatpush.msra.mxu0 %v238
        %278 = vmatpush.msra.mxu0 %v237
        %279 = vmatpush.msra.mxu0 %v236
        %280 = vmatmul.f32.gmra.mxu0 %v255
        %v281 = vpop.f32.mrf.mxu0
        %v282 = vadd.f32 %v246, %v281
        %283 = vmatmul.f32.gmra.mxu0 %v258
        %v284 = vpop.f32.mrf.mxu0
        %v285 = vadd.f32 %v251, %v284
        %286 = vdwg.mxu0
        %287 = vst [vmem:[%s233] sm:$0xff] %v282
        %288 = vst [vmem:[%s233 + $0x8] sm:$0xff] %v285
        %s289 = sand.u32 %s106, 1
        %s290 = sand.u32 %s106, 1
        %s291 = smul.addr %s290, 16
        %s292 = scalar_lea.vmem [#allocation3], %s291
        // Predicated region
        $region71: #{conv_transpose_4x4_s2_p1.1} parent=65 // pred_check
          %p293 = pneg %p116
        $region72: #{conv_transpose_4x4_s2_p1.1} parent=65 // pred_check_branch
          %295 = sbr.rel (%p293) target = $region74
        $region73: #{conv_transpose_4x4_s2_p1.1} parent=65 // pred_region
          %s296 = smul.addr %s18, 4
          %s297 = sadd.s32 %s19, %s296
          %s298 = smul.addr %s297, 8
          %s299 = scalar_lea.vmem %s3, %s298
          // Predicated region
          $region75: #{conv_transpose_4x4_s2_p1.1} parent=73 // pred_check
            _
          $region76: #{conv_transpose_4x4_s2_p1.1} parent=73 // pred_check_branch
            %301 = sbr.rel (0) target = $region78
          $region77: #{conv_transpose_4x4_s2_p1.1} parent=73 // pred_region
            // Predicated region
            $region79: #{conv_transpose_4x4_s2_p1.1} parent=77 // pred_check
              _
            $region80: #{conv_transpose_4x4_s2_p1.1} parent=77 // pred_check_branch
              %303 = sbr.rel (0) target = $region82
            $region81: #{conv_transpose_4x4_s2_p1.1} parent=77 // pred_region
              // Predicated region
              $region94: #{conv_transpose_4x4_s2_p1.1} parent=81 // pred_check
                _
              $region95: #{conv_transpose_4x4_s2_p1.1} parent=81 // pred_check_branch
                %321 = sbr.rel (0) target = $region97
              $region96: #{conv_transpose_4x4_s2_p1.1} parent=81 // pred_region
                loop: start=0, step=1, limit=1
                $region98: #{conv_transpose_4x4_s2_p1.1} parent=96 // loop_pre_header
                  _
                $region99: #{conv_transpose_4x4_s2_p1.1} parent=96 // loop_header
                  %s323 = sphi 0, %s327
                  %p324 = scmp.ge.s32.totalorder %s323, 1
                  %s328 = sphi %s292, %s292
                  %s329 = sphi %s299, %s299
                $region100: #{conv_transpose_4x4_s2_p1.1} parent=96 // loop_header_branch
                  %326 = sbr.rel (%p324) target = $region104
                $region101: #{conv_transpose_4x4_s2_p1.1} parent=96 // loop_body
                  %v330 = vld [vmem:[%s328] sm:$0xff]
                  %331 = vst [vmem:[%s329] sm:$0xff] %v330
                  %v332 = vld [vmem:[%s328 + $0x8] sm:$0xff]
                  %333 = vst [vmem:[%s329 + $0x10] sm:$0xff] %v332
                $region102: #{conv_transpose_4x4_s2_p1.1} parent=96 // loop_footer
                  %s327 = sadd.s32 1, %s323
                $region103: #{conv_transpose_4x4_s2_p1.1} parent=96 // loop_footer_branch
                  %322 = sbr.rel target = $region99
                $region104: #{conv_transpose_4x4_s2_p1.1} parent=96 // loop_exit
                  _
              $region97: #{conv_transpose_4x4_s2_p1.1} parent=81 // pred_fallthru
                _
              // Predicated region
              $region105: #{conv_transpose_4x4_s2_p1.1} parent=81 // pred_check
                _
              $region106: #{conv_transpose_4x4_s2_p1.1} parent=81 // pred_check_branch
                %335 = sbr.rel target = $region108
              $region107: #{conv_transpose_4x4_s2_p1.1} parent=81 // pred_region
                _
              $region108: #{conv_transpose_4x4_s2_p1.1} parent=81 // pred_fallthru
                _
            $region82: #{conv_transpose_4x4_s2_p1.1} parent=77 // pred_fallthru
              _
            // Predicated region
            $region83: #{conv_transpose_4x4_s2_p1.1} parent=77 // pred_check
              _
            $region84: #{conv_transpose_4x4_s2_p1.1} parent=77 // pred_check_branch
              %305 = sbr.rel target = $region86
            $region85: #{conv_transpose_4x4_s2_p1.1} parent=77 // pred_region
              %s307 = ssub.s32 256, 1
              loop: start=0, step=1, limit=1
              $region87: #{conv_transpose_4x4_s2_p1.1} parent=85 // loop_pre_header
                _
              $region88: #{conv_transpose_4x4_s2_p1.1} parent=85 // loop_header
                %s309 = sphi 0, %s313
                %p310 = scmp.ge.s32.totalorder %s309, 1
                %s314 = sphi %s292, %s292
                %s315 = sphi %s299, %s299
              $region89: #{conv_transpose_4x4_s2_p1.1} parent=85 // loop_header_branch
                %312 = sbr.rel (%p310) target = $region93
              $region90: #{conv_transpose_4x4_s2_p1.1} parent=85 // loop_body
                %v316 = vld [vmem:[%s314] sm:%s307]
                %317 = vst [vmem:[%s315] sm:%s307] %v316
                %v318 = vld [vmem:[%s314 + $0x8] sm:%s307]
                %319 = vst [vmem:[%s315 + $0x10] sm:%s307] %v318
              $region91: #{conv_transpose_4x4_s2_p1.1} parent=85 // loop_footer
                %s313 = sadd.s32 1, %s309
              $region92: #{conv_transpose_4x4_s2_p1.1} parent=85 // loop_footer_branch
                %308 = sbr.rel target = $region88
              $region93: #{conv_transpose_4x4_s2_p1.1} parent=85 // loop_exit
                _
            $region86: #{conv_transpose_4x4_s2_p1.1} parent=77 // pred_fallthru
              _
          $region78: #{conv_transpose_4x4_s2_p1.1} parent=73 // pred_fallthru
            _
          %336 = vnop
        $region74: #{conv_transpose_4x4_s2_p1.1} parent=65 // pred_fallthru
          _
      $region66: #{conv_transpose_4x4_s2_p1.1} parent=5 // pred_fallthru
        _
      %p337 = scmp.le.s32.totalorder 2, %s9
      // Predicated region
      $region109: #{conv_transpose_4x4_s2_p1.1} parent=5 // pred_check
        %p338 = pneg %p337
      $region110: #{conv_transpose_4x4_s2_p1.1} parent=5 // pred_check_branch
        %340 = sbr.rel (%p338) target = $region112
      $region111: #{conv_transpose_4x4_s2_p1.1} parent=5 // pred_region
        %s341 = ssub.s32 %s9, 2
        // Predicated region
        $region113: #{conv_transpose_4x4_s2_p1.1} parent=111 // pred_check
          %p342 = pneg %p122
        $region114: #{conv_transpose_4x4_s2_p1.1} parent=111 // pred_check_branch
          %344 = sbr.rel (%p342) target = $region116
        $region115: #{conv_transpose_4x4_s2_p1.1} parent=111 // pred_region
          %s345 = sand.u32 %s107, 1
          %s346 = sand.u32 %s107, 1
          %s347 = smul.addr %s346, 16
          %s348 = scalar_lea.vmem [#allocation3], %s347
        $region116: #{conv_transpose_4x4_s2_p1.1} parent=111 // pred_fallthru
          _
      $region112: #{conv_transpose_4x4_s2_p1.1} parent=5 // pred_fallthru
        _
    $region6: #{conv_transpose_4x4_s2_p1.1} parent=1 // loop_footer
      %s13 = sadd.s32 1, %s9
    $region7: #{conv_transpose_4x4_s2_p1.1} parent=1 // loop_footer_branch
      %8 = sbr.rel target = $region3
    $region8: #{conv_transpose_4x4_s2_p1.1} parent=1 // loop_exit
      _

</llo_original>
